<compile_context>
chip_gen: v5e
topology: v5e:2x2
jax: 0.10.0
libtpu: 0.0.40
codegen_flags: <defaults>
</compile_context>

<pallas_src>
import jax
import jax.numpy as jnp
from jax.experimental import pallas as pl
from jax.experimental.pallas import tpu as pltpu


_VMEM_LIMIT = 48 * 1024 * 1024  # > 32 MiB scoped default, < v7x's 64 MiB physical


def _pick_tile(extent, align, target):
    """Largest multiple of `align` <= target that divides `extent`, else full extent."""
    if extent <= target or extent % align != 0:
        return extent          # full-extent block is always legal
    t = (target // align) * align
    while t >= align:
        if extent % t == 0:
            return t
        t -= align
    return extent


# ---------------------------------------------------------------------------
# Kernel 1: the module's own op — product t-norm over stacked subclause outputs
# ---------------------------------------------------------------------------
def _tnorm_prod_kernel(stk_ref, o_ref):
    """Product over the leading (subclause) axis of one (N, tb, tt) block."""
    n = stk_ref.shape[0]                         # static
    acc = stk_ref[0].astype(jnp.float32)         # first factor: direct copy, no ones-init
    for k in range(1, n):                        # unrolled multiplies on the VPU
        acc = acc * stk_ref[k].astype(jnp.float32)
    o_ref[...] = acc.astype(o_ref.dtype)


def prod_tnorm_pallas(stacked):
    """torch.prod(torch.stack(fs), dim=0) for `stacked` of shape (N, B, T)."""
    n, b, t = stacked.shape
    tb = _pick_tile(b, 8, 256)
    tt = _pick_tile(t, 128, 512)
    grid = (b // tb, t // tt)
    return pl.pallas_call(
        _tnorm_prod_kernel,
        out_shape=jax.ShapeDtypeStruct((b, t), stacked.dtype),
        grid_spec=pltpu.PrefetchScalarGridSpec(
            num_scalar_prefetch=0,
            grid=grid,
            in_specs=[pl.BlockSpec((n, tb, tt), lambda i, j: (0, i, j))],
            out_specs=pl.BlockSpec((tb, tt), lambda i, j: (i, j)),
        ),
        compiler_params=pltpu.CompilerParams(
            dimension_semantics=("parallel", "parallel"),
            vmem_limit_bytes=_VMEM_LIMIT,
        ),
    )(stacked)


def tnorm_forward(subclause_outputs):
    """Tnorm.forward with tnorm=prod_tnorm, given the subclause output list."""
    if len(subclause_outputs) == 1:
        return subclause_outputs[0]
    return prod_tnorm_pallas(jnp.stack(subclause_outputs, axis=0))


# ---------------------------------------------------------------------------
# Kernel 2: fused subclause producer + t-norm (the (N,B,T) stack never hits HBM)
# ---------------------------------------------------------------------------
def _tnorm_fused_kernel(xz_ref, w_ref, b_ref, o_ref):
    """acc = prod_k sigmoid(xz @ W_k + b_k) for one (tb, tt) output tile."""
    xz = xz_ref[...]                                             # (tb, 2D)
    n = w_ref.shape[0]                                           # static
    acc = None
    for k in range(n):                                           # unrolled
        z = jnp.dot(xz, w_ref[k], preferred_element_type=jnp.float32)   # MXU
        z = z + b_ref[pl.ds(k, 1), :]                            # (1, tt) broadcast
        s = 1.0 / (1.0 + jnp.exp(-z))                            # sigmoid on EUP
        acc = s if acc is None else acc * s                      # product on VPU
    o_ref[...] = acc.astype(o_ref.dtype)


def tnorm_fused_pallas(x, xn, w, wn, bias):
    """Fused Tnorm.forward for synthetic subclauses sigmoid(x@W_k + xn@Wn_k + b_k).

    x, xn: (B, D); w, wn: (N, D, T); bias: (N, T) -> output (B, T).
    """
    b, d = x.shape
    n, _, t = w.shape
    xz = jnp.concatenate([x, xn], axis=1)                        # (B, 2D)
    wz = jnp.concatenate([w, wn], axis=1)                        # (N, 2D, T)
    tb = _pick_tile(b, 8, 256)
    tt = _pick_tile(t, 128, 512)
    grid = (b // tb, t // tt)
    return pl.pallas_call(
        _tnorm_fused_kernel,
        out_shape=jax.ShapeDtypeStruct((b, t), x.dtype),
        grid_spec=pltpu.PrefetchScalarGridSpec(
            num_scalar_prefetch=0,
            grid=grid,
            in_specs=[
                pl.BlockSpec((tb, 2 * d), lambda i, j: (i, 0)),
                pl.BlockSpec((n, 2 * d, tt), lambda i, j: (0, 0, j)),
                pl.BlockSpec((n, tt), lambda i, j: (0, j)),
            ],
            out_specs=pl.BlockSpec((tb, tt), lambda i, j: (i, j)),
        ),
        compiler_params=pltpu.CompilerParams(
            dimension_semantics=("parallel", "parallel"),
            vmem_limit_bytes=_VMEM_LIMIT,
        ),
    )(xz, wz, bias)


# ---------------------------------------------------------------------------
# Synthetic subclause parameters / plain-JAX reference (glue only).
# TODO(synk): the reference Tnorm leaves `subclauses` abstract; sigmoid-linear
#             subclauses are synthesized here so the forward pass is runnable.
# ---------------------------------------------------------------------------
def synth_subclause_params(key, d_in, n_terms, num_subclauses):
    kw, kwn, kb = jax.random.split(key, 3)
    w = jax.random.normal(kw, (num_subclauses, d_in, n_terms), jnp.float32) * 0.1
    wn = jax.random.normal(kwn, (num_subclauses, d_in, n_terms), jnp.float32) * 0.1
    bias = jax.random.normal(kb, (num_subclauses, n_terms), jnp.float32) * 0.1
    return w, wn, bias


def subclause_outputs_ref(x, xn, w, wn, bias):
    """Plain-JAX subclause outputs (list of N arrays), high-precision matmuls."""
    hp = jax.lax.Precision.HIGHEST
    outs = []
    for k in range(w.shape[0]):
        z = jnp.dot(x, w[k], precision=hp) + jnp.dot(xn, wn[k], precision=hp) + bias[k]
        outs.append(1.0 / (1.0 + jnp.exp(-z)))
    return outs


if __name__ == "__main__":
    key = jax.random.PRNGKey(0)
    kx, kxn, kp = jax.random.split(key, 3)

    batch, d_in, n_terms, num_subclauses = 8, 32, 128, 4
    x = jax.random.normal(kx, (batch, d_in), jnp.float32)
    xn = jax.random.normal(kxn, (batch, d_in), jnp.float32)
    w, wn, bias = synth_subclause_params(kp, d_in, n_terms, num_subclauses)

    # Plain-JAX subclause outputs + reference (== torch.prod(torch.stack(...), 0)).
    sub_outs = subclause_outputs_ref(x, xn, w, wn, bias)
    ref = jnp.prod(jnp.stack(sub_outs, axis=0), axis=0)

    # 1) Pure t-norm kernel (the module's own op) over the given subclause outputs.
    out_prod = jax.block_until_ready(tnorm_forward(sub_outs))
    assert out_prod.shape == (batch, n_terms)
    assert jnp.allclose(out_prod, ref, atol=1e-6, rtol=1e-6)

    # 2) Fused producer + t-norm kernel.  Looser tolerance covers MXU f32
    #    pass-count / EUP-exp differences vs. the HIGHEST-precision XLA reference.
    out_fused = jax.block_until_ready(tnorm_fused_pallas(x, xn, w, wn, bias))
    assert out_fused.shape == (batch, n_terms)
    assert jnp.allclose(out_fused, ref, atol=2e-3, rtol=2e-3)

    print("KERNEL_OK")
</pallas_src>

<mosaic_0001>
module attributes {stable_mosaic.version = 11 : i64} {
  func.func @_tnorm_prod_kernel(%arg0: i32, %arg1: i32, %arg2: memref<4x8x128xf32, #tpu.memory_space<vmem>>, %arg3: memref<8x128xf32, #tpu.memory_space<vmem>>) attributes {dimension_semantics = [#tpu.dimension_semantics<parallel>, #tpu.dimension_semantics<parallel>], iteration_bounds = array<i64: 1, 1>, scalar_prefetch = 0 : i64, scratch_operands = 0 : i64, tpu.core_type = #tpu.core_type<tc>, window_params = [{transform_indices = @transform_0, window_bounds = array<i64: 4, 8, 128>}, {transform_indices = @transform_1, window_bounds = array<i64: 8, 128>}]} {
    %c0 = arith.constant 0 : index
    %c0_0 = arith.constant 0 : index
    %c0_1 = arith.constant 0 : index
    %0 = vector.load %arg2[%c0, %c0_0, %c0_1] : memref<4x8x128xf32, #tpu.memory_space<vmem>>, vector<1x8x128xf32>
    %1 = vector.shape_cast %0 : vector<1x8x128xf32> to vector<8x128xf32>
    %c1 = arith.constant 1 : index
    %c0_2 = arith.constant 0 : index
    %c0_3 = arith.constant 0 : index
    %2 = vector.load %arg2[%c1, %c0_2, %c0_3] : memref<4x8x128xf32, #tpu.memory_space<vmem>>, vector<1x8x128xf32>
    %3 = vector.shape_cast %2 : vector<1x8x128xf32> to vector<8x128xf32>
    %4 = arith.mulf %1, %3 : vector<8x128xf32>
    %c2 = arith.constant 2 : index
    %c0_4 = arith.constant 0 : index
    %c0_5 = arith.constant 0 : index
    %5 = vector.load %arg2[%c2, %c0_4, %c0_5] : memref<4x8x128xf32, #tpu.memory_space<vmem>>, vector<1x8x128xf32>
    %6 = vector.shape_cast %5 : vector<1x8x128xf32> to vector<8x128xf32>
    %7 = arith.mulf %4, %6 : vector<8x128xf32>
    %c3 = arith.constant 3 : index
    %c0_6 = arith.constant 0 : index
    %c0_7 = arith.constant 0 : index
    %8 = vector.load %arg2[%c3, %c0_6, %c0_7] : memref<4x8x128xf32, #tpu.memory_space<vmem>>, vector<1x8x128xf32>
    %9 = vector.shape_cast %8 : vector<1x8x128xf32> to vector<8x128xf32>
    %10 = arith.mulf %7, %9 : vector<8x128xf32>
    %c0_8 = arith.constant 0 : index
    %c0_9 = arith.constant 0 : index
    %11 = vector.load %arg3[%c0_8, %c0_9] : memref<8x128xf32, #tpu.memory_space<vmem>>, vector<8x128xf32>
    tpu.vector_store %arg3[%c0_8, %c0_9], %10 {strides = array<i32>} : memref<8x128xf32, #tpu.memory_space<vmem>>, vector<8x128xf32>,
    return
  }
  func.func @transform_0(%arg0: i32, %arg1: i32) -> (i32, i32, i32) {
    %c0_i32 = arith.constant 0 : i32
    %c0_i32_0 = arith.constant 0 : i32
    return %c0_i32, %arg0, %arg1 : i32, i32, i32
  }
  func.func @transform_1(%arg0: i32, %arg1: i32) -> (i32, i32) {
    %c0_i32 = arith.constant 0 : i32
    return %arg0, %arg1 : i32, i32
  }
}

</mosaic_0001>

<llo_original>
// kernel: tpu_custom_call.1
$region0: #{tpu_custom_call.1}
  #allocation0 [shape = 'u32[]', space=smem, size = 0x4, offset = 0x4, fixed_abs, tag = 'smem constant byte address 0x4 - core index']
  #allocation1 [shape = 'u32[72,128]{1,0:T(1,128)}', space=vmem, size = 0x9000, scoped, tag = 'internal scratch']
  %s0 = inlined_call_operand.hbm [shape: f32[4,8,128], index: 0, kind: input, shape index: {}]
  %s1 = inlined_call_operand.hbm [shape: f32[8,128], index: 1, kind: output, shape index: {}]
  %s2 = sld [smem:[#allocation0]]
  $region18: #{tpu_custom_call.1} parent=0
    _
  %s4 = ssub.s32 1, %s2
  %s5 = scalar_select 0, %s4, %s2
  $region1: #{tpu_custom_call.1} parent=0
    #allocation2 [shape = 'u8[16384]{0}', space=vmem, size = 0x4000, scoped, tag = 'input window, operand 0, single buffered']
    #allocation3 [shape = 's32[1]{0}', space=sflag, size = 0x4, scoped, tag = 'scoped memory for tpu_custom_call.1']
    #allocation4 [shape = 's32[1]{0}', space=sflag, size = 0x4, scoped, tag = 'scoped memory for tpu_custom_call.1']
    #allocation5 [shape = 'u8[4096]{0}', space=vmem, size = 0x1000, scoped, tag = 'output window, operand 0, single buffered']
    %6 = vsyncpa [#allocation3], 0
    %7 = vsyncpa [#allocation4], 0
    // Predicated region
    $region2: #{tpu_custom_call.1} parent=1 // pred_check
      _
    $region3: #{tpu_custom_call.1} parent=1 // pred_check_branch
      %9 = sbr.rel (0) target = $region5
    $region4: #{tpu_custom_call.1} parent=1 // pred_region
      %11 = vsyncadd [#allocation3], 0
      %s12 = sshll.u32 %s0, 4
      %s13 = int_to_ptr.hbm [resolvable:$true] %s12
      %s14 = sshll.u32 [#allocation2], 4
      %s15 = int_to_ptr.vmem [resolvable:$true] %s14
      %20 = dma.hbm_to_vmem [thread:$0]  %s13, 512, %s15, [#allocation3], 128, 128, 8
    $region5: #{tpu_custom_call.1} parent=1 // pred_fallthru
      _
    // Predicated region
    $region6: #{tpu_custom_call.1} parent=1 // pred_check
      _
    $region7: #{tpu_custom_call.1} parent=1 // pred_check_branch
      %22 = sbr.rel (0) target = $region9
    $region8: #{tpu_custom_call.1} parent=1 // pred_region
      %24 = dma.done [#allocation3], 512
    $region9: #{tpu_custom_call.1} parent=1 // pred_fallthru
      _
    %v25 = vld [vmem:[#allocation2] sm:$0xff]
    %s26 = scalar_lea.vmem [#allocation2], 8
    %v27 = vld [vmem:[%s26] sm:$0xff]
    %v28 = vmul.f32 %v25, %v27
    %s29 = scalar_lea.vmem [#allocation2], 16
    %v30 = vld [vmem:[%s29] sm:$0xff]
    %v31 = vmul.f32 %v28, %v30
    %s32 = scalar_lea.vmem [#allocation2], 24
    %v33 = vld [vmem:[%s32] sm:$0xff]
    %v34 = vmul.f32 %v31, %v33
    %35 = vst [vmem:[#allocation5] sm:$0xff] %v34
    // Predicated region
    $region10: #{tpu_custom_call.1} parent=1 // pred_check
      _
    $region11: #{tpu_custom_call.1} parent=1 // pred_check_branch
      %37 = sbr.rel (0) target = $region13
    $region12: #{tpu_custom_call.1} parent=1 // pred_region
      %39 = vsyncadd [#allocation4], 0
      %s41 = sshll.u32 [#allocation5], 4
      %s42 = int_to_ptr.vmem [resolvable:$true] %s41
      %s43 = sshll.u32 %s1, 4
      %s44 = int_to_ptr.hbm [resolvable:$true] %s43
      %46 = dma.vmem_to_hbm [thread:$0]  %s42, 128, %s44, [#allocation4]
    $region13: #{tpu_custom_call.1} parent=1 // pred_fallthru
      _
    // Predicated region
    $region14: #{tpu_custom_call.1} parent=1 // pred_check
      _
    $region15: #{tpu_custom_call.1} parent=1 // pred_check_branch
      %48 = sbr.rel (0) target = $region17
    $region16: #{tpu_custom_call.1} parent=1 // pred_region
      %50 = dma.done [#allocation4], 128
    $region17: #{tpu_custom_call.1} parent=1 // pred_fallthru
      _
    %51 = vsyncpa [#allocation3], 1
    %52 = vsyncpa [#allocation4], 1

</llo_original>
